<compile_context>
chip_gen: v5e
topology: v5e:2x2
jax: 0.10.0
libtpu: 0.0.40
codegen_flags: <defaults>
</compile_context>

<pallas_src>
import functools
import math

import jax
import jax.numpy as jnp
from jax import lax
from jax.experimental import pallas as pl
from jax.experimental.pallas import tpu as pltpu

_LANES = 128
_SUBLANES = 8
_TARGET_TILE_BYTES = 2 * 1024 * 1024   # ~2 MiB per input stream per pipeline buffer
_N_REDUCE_CHUNKS = 2                   # outer "parallel" axis (v7x has 2 TensorCores)
_VMEM_LIMIT_BYTES = 32 * 1024 * 1024


# ---------------------------------------------------------------------------
# Helpers
# ---------------------------------------------------------------------------
def _block_rows_for(itemsize):
    """Rows per tile so one (rows, 128) tile is ~_TARGET_TILE_BYTES (dtype-aware)."""
    rows = _TARGET_TILE_BYTES // (_LANES * int(itemsize))
    return max(_SUBLANES, (rows // _SUBLANES) * _SUBLANES)


def _to_2d(x):
    """Flatten to a lane-dense (rows, 128) view.

    Free (bitcast reshape) when numel % 128 == 0 (the common case).  The rare
    ragged case pays one pad copy per input; padded elements are masked out
    in-kernel so they can never contribute to a reduction.
    """
    flat = x.reshape(-1)
    n = flat.shape[0]
    padded = pl.cdiv(n, _LANES) * _LANES
    if padded != n:
        # TODO(synk): a rank-1 block path would avoid this copy but risks Mosaic
        # relayouts; kept as a rare fallback only.
        flat = jnp.pad(flat, (0, padded - n))
    return flat.reshape(padded // _LANES, _LANES)


def _tail_mask(block_rows, row0, n_valid):
    """Validity mask for a (block_rows,128) tile whose first row is global row `row0`."""
    full_rows = n_valid // _LANES
    rem = n_valid % _LANES
    row = lax.broadcasted_iota(jnp.int32, (block_rows, _LANES), 0) + row0
    lane = lax.broadcasted_iota(jnp.int32, (block_rows, _LANES), 1)
    return (row < full_rows) | ((row == full_rows) & (lane < rem))


# ---------------------------------------------------------------------------
# Reduction kernels (sum of elem_fn(*inputs) over the valid elements)
# ---------------------------------------------------------------------------
def _make_single_block_reduce_kernel(n_inputs, elem_fn, rows, n_valid):
    """out[0,:] = lane-wise partial sums over one resident block (no scratch)."""
    need_mask = rows * _LANES != n_valid

    def kernel(*refs):
        in_refs, out_ref = refs[:n_inputs], refs[n_inputs]
        e = elem_fn(*[r[...].astype(jnp.float32) for r in in_refs])
        if need_mask:
            e = jnp.where(_tail_mask(rows, 0, n_valid), e, 0.0)
        out_ref[...] = jnp.sum(e, axis=0, keepdims=True)

    return kernel


def _make_chunked_reduce_kernel(n_inputs, elem_fn, block_rows, n_blocks, n_valid,
                                inner_steps, has_dummy):
    """Streaming reduction over a (n_chunks, inner_steps) grid.

    Each chunk accumulates into a tiny (8,128) f32 VMEM scratch (pure-VPU vreg
    adds; no per-step accumulator streaming) and writes its lane-wise partial
    sums into out[chunk, :] on its last inner step.
    """
    groups = block_rows // _SUBLANES
    need_mask = n_blocks * block_rows * _LANES != n_valid
    last_row0 = (n_blocks - 1) * block_rows

    def kernel(*refs):
        in_refs = refs[:n_inputs]
        out_ref = refs[n_inputs]
        acc_ref = refs[n_inputs + 1]
        c = pl.program_id(0)
        i = pl.program_id(1)
        blk = c * inner_steps + i          # global row-block index

        @pl.when(i == 0)
        def _():
            acc_ref[...] = jnp.zeros_like(acc_ref)

        def accumulate(mask_tail):
            e = elem_fn(*[r[...].astype(jnp.float32) for r in in_refs])
            if mask_tail:
                e = jnp.where(_tail_mask(block_rows, last_row0, n_valid), e, 0.0)
            # (block_rows,128) -> (groups,8,128) is a free vreg regrouping; the
            # axis-0 sum is a tree of pure-VPU vreg adds into the (8,128) scratch.
            acc_ref[...] += jnp.sum(e.reshape(groups, _SUBLANES, _LANES), axis=0)

        if need_mask:
            # Only the last real block pays the iota/compare/select tail mask;
            # dummy trailing steps (blk >= n_blocks) accumulate nothing.
            @pl.when(blk == n_blocks - 1)
            def _():
                accumulate(True)

            @pl.when(blk < n_blocks - 1)
            def _():
                accumulate(False)
        elif has_dummy:
            @pl.when(blk < n_blocks)
            def _():
                accumulate(False)
        else:
            accumulate(False)

        @pl.when(i == inner_steps - 1)
        def _():
            # Per-chunk lane-wise partials; the cross-lane finish happens outside.
            out_ref[...] = jnp.sum(acc_ref[...], axis=0, keepdims=True)

    return kernel


def _pallas_reduce_sum(arrays_2d, elem_fn, n_valid):
    """float32 sum of elem_fn(*arrays) over the first n_valid flat elements."""
    rows = arrays_2d[0].shape[0]
    n_inputs = len(arrays_2d)
    itemsize = max(jnp.dtype(a.dtype).itemsize for a in arrays_2d)
    block_rows = _block_rows_for(itemsize)

    if rows <= block_rows:
        # Whole problem fits one resident tile: no scratch, no pipeline.
        partials = pl.pallas_call(
            _make_single_block_reduce_kernel(n_inputs, elem_fn, rows, n_valid),
            out_shape=jax.ShapeDtypeStruct((1, _LANES), jnp.float32),
            grid_spec=pltpu.PrefetchScalarGridSpec(
                num_scalar_prefetch=0,
                grid=(1,),
                in_specs=[pl.BlockSpec((rows, _LANES), lambda i: (0, 0))
                          for _ in arrays_2d],
                out_specs=pl.BlockSpec((1, _LANES), lambda i: (0, 0)),
            ),
            compiler_params=pltpu.CompilerParams(
                dimension_semantics=("arbitrary",),
                vmem_limit_bytes=_VMEM_LIMIT_BYTES),
        )(*arrays_2d)
        return jnp.sum(partials)

    n_blocks = pl.cdiv(rows, block_rows)
    n_chunks = min(_N_REDUCE_CHUNKS, n_blocks)
    inner_steps = pl.cdiv(n_blocks, n_chunks)
    has_dummy = n_chunks * inner_steps != n_blocks

    def in_map(c, i):
        # Clamp the (at most n_chunks-1) dummy trailing steps to a valid block.
        return (jnp.minimum(c * inner_steps + i, n_blocks - 1), 0)

    partials = pl.pallas_call(
        _make_chunked_reduce_kernel(n_inputs, elem_fn, block_rows, n_blocks,
                                    n_valid, inner_steps, has_dummy),
        out_shape=jax.ShapeDtypeStruct((n_chunks, _LANES), jnp.float32),
        grid_spec=pltpu.PrefetchScalarGridSpec(
            num_scalar_prefetch=0,
            grid=(n_chunks, inner_steps),
            in_specs=[pl.BlockSpec((block_rows, _LANES), in_map)
                      for _ in arrays_2d],
            out_specs=pl.BlockSpec((1, _LANES), lambda c, i: (c, 0)),
            scratch_shapes=[pltpu.VMEM((_SUBLANES, _LANES), jnp.float32)],
        ),
        compiler_params=pltpu.CompilerParams(
            # Outer chunk axis "parallel": v7x's 2 TensorCores each stream half
            # the input; single-TC v5e/v6e are unaffected.
            dimension_semantics=("parallel", "arbitrary"),
            vmem_limit_bytes=_VMEM_LIMIT_BYTES),
    )(*arrays_2d)
    return jnp.sum(partials)


# ---------------------------------------------------------------------------
# Weighted MSE loss core (reviewed kernel): mean / sum / none
# ---------------------------------------------------------------------------
def _make_mse_elementwise_kernel(has_weight, loss_weight):
    def kernel(*refs):
        if has_weight:
            pred_ref, target_ref, weight_ref, out_ref = refs
        else:
            pred_ref, target_ref, out_ref = refs
        d = pred_ref[...].astype(jnp.float32) - target_ref[...].astype(jnp.float32)
        sq = d * d
        if has_weight:
            sq = sq * weight_ref[...].astype(jnp.float32)
        if loss_weight != 1.0:
            sq = sq * jnp.float32(loss_weight)
        out_ref[...] = sq.astype(out_ref.dtype)

    return kernel


@functools.partial(jax.jit, static_argnames=("loss_weight", "reduction"))
def mse_loss_pallas(pred, target, weight=None, *, loss_weight=1.0, reduction="mean"):
    """loss_weight * reduce((pred - target)**2 [* weight]).

    NOTE: 'mean' divides by the total element count even with an explicit weight
    (basicsr / F.mse_loss semantics), not by sum(weight).
    """
    if reduction not in ("none", "mean", "sum"):
        raise ValueError(f"Unsupported reduction mode: {reduction}")

    orig_shape, orig_dtype = pred.shape, pred.dtype
    n = math.prod(orig_shape)
    has_weight = weight is not None

    arrays = [_to_2d(pred), _to_2d(target)]
    if has_weight:
        arrays.append(_to_2d(weight))
    rows = arrays[0].shape[0]

    if reduction == "none":
        itemsize = max(jnp.dtype(a.dtype).itemsize for a in arrays)
        block_rows = min(rows, _block_rows_for(itemsize))
        grid_len = pl.cdiv(rows, block_rows)
        out = pl.pallas_call(
            _make_mse_elementwise_kernel(has_weight, float(loss_weight)),
            out_shape=jax.ShapeDtypeStruct((rows, _LANES), orig_dtype),
            grid_spec=pltpu.PrefetchScalarGridSpec(
                num_scalar_prefetch=0,
                grid=(grid_len,),
                in_specs=[pl.BlockSpec((block_rows, _LANES), lambda i: (i, 0))
                          for _ in arrays],
                out_specs=pl.BlockSpec((block_rows, _LANES), lambda i: (i, 0)),
            ),
            compiler_params=pltpu.CompilerParams(
                dimension_semantics=("parallel",),
                vmem_limit_bytes=_VMEM_LIMIT_BYTES),
        )(*arrays)
        if rows * _LANES != n:
            out = out.reshape(-1)[:n]
        return out.reshape(orig_shape)

    if has_weight:
        elem = lambda p, t, w: (p - t) * (p - t) * w
    else:
        elem = lambda p, t: (p - t) * (p - t)
    total = _pallas_reduce_sum(arrays, elem, n)
    scale = float(loss_weight) / float(n) if reduction == "mean" else float(loss_weight)
    return total * jnp.float32(scale)


# ---------------------------------------------------------------------------
# GANLoss('vanilla') criterion + generator half of AdversarialLoss.forward
# ---------------------------------------------------------------------------
@functools.partial(jax.jit, static_argnames=("target_is_real", "is_disc",
                                             "real_label_val", "fake_label_val",
                                             "loss_weight"))
def gan_vanilla_loss_pallas(x, *, target_is_real, is_disc=False,
                            real_label_val=1.0, fake_label_val=0.0, loss_weight=1.0):
    """GANLoss(gan_type='vanilla'): BCEWithLogits(x, const label), mean-reduced.

    Matches GANLoss.forward: loss_weight is only applied when is_disc=False.
    """
    n = math.prod(x.shape)
    t = float(real_label_val if target_is_real else fake_label_val)

    def elem(v):
        # bce_with_logits(v, t) = softplus(v) - t*v, numerically-stable form.
        return jnp.maximum(v, 0.0) - jnp.float32(t) * v + jnp.log(1.0 + jnp.exp(-jnp.abs(v)))

    total = _pallas_reduce_sum([_to_2d(x)], elem, n)
    loss = total / jnp.float32(n)
    if not is_disc:
        loss = loss * jnp.float32(loss_weight)
    return loss


def _mean_pallas(x):
    n = math.prod(x.shape)
    return _pallas_reduce_sum([_to_2d(x)], lambda v: v, n) / jnp.float32(n)


@jax.jit
def adversarial_generator_loss_pallas(d_fake, d_real):
    """Generator half of AdversarialLoss.forward (loss_g) on discriminator outputs.

    loss_g = 0.5 * BCEWithLogits(d_real - mean(d_fake), fake_label)
           + 0.5 * BCEWithLogits(d_fake - mean(d_real), real_label)
    """
    mean_fake = _mean_pallas(d_fake)
    mean_real = _mean_pallas(d_real)
    # The relativistic scalar shift is a tiny XLA elementwise pass over the
    # (small) discriminator outputs before the reduction kernels.
    g_real = gan_vanilla_loss_pallas(d_real - mean_fake, target_is_real=False,
                                     is_disc=False) * 0.5
    g_fake = gan_vanilla_loss_pallas(d_fake - mean_real, target_is_real=True,
                                     is_disc=False) * 0.5
    return g_real + g_fake


# ---------------------------------------------------------------------------
# Demo / self-check
# ---------------------------------------------------------------------------
if __name__ == "__main__":
    keys = jax.random.split(jax.random.PRNGKey(0), 10)

    # 1) Small feature-map shapes: mean (no weight), sum (weighted), none (weighted).
    N, C, H, W = 2, 4, 16, 16
    pred = jax.random.normal(keys[0], (N, C, H, W), dtype=jnp.float32)
    target = jax.random.normal(keys[1], (N, C, H, W), dtype=jnp.float32)
    weight = jax.random.uniform(keys[2], (N, C, H, W), dtype=jnp.float32)

    out_mean = mse_loss_pallas(pred, target, reduction="mean")
    out_sum = mse_loss_pallas(pred, target, weight, reduction="sum")
    out_none = mse_loss_pallas(pred, target, weight, reduction="none")

    assert jnp.allclose(out_mean, jnp.mean((pred - target) ** 2), rtol=1e-5, atol=1e-5)
    assert jnp.allclose(out_sum, jnp.sum((pred - target) ** 2 * weight), rtol=1e-5, atol=1e-4)
    assert jnp.allclose(out_none, (pred - target) ** 2 * weight, rtol=1e-5, atol=1e-6)
    assert out_none.shape == (N, C, H, W)

    # 2) Ragged numel (not a multiple of 128): exercises the in-kernel tail mask.
    p_r = jax.random.normal(keys[3], (3, 5, 7, 11), dtype=jnp.float32)
    t_r = jax.random.normal(keys[4], (3, 5, 7, 11), dtype=jnp.float32)
    out_r = mse_loss_pallas(p_r, t_r, reduction="mean")
    assert jnp.allclose(out_r, jnp.mean((p_r - t_r) ** 2), rtol=1e-5, atol=1e-5)

    # 3) Medium size: exercises the chunked ("parallel","arbitrary") 2-D grid,
    #    the (8,128) scratch accumulator, the dummy-step clamp and the gated mask.
    shape_m = (4, 8, 128, 260)   # 1,064,960 elems -> 8320 rows -> 3 blocks of 4096
    p_m = jax.random.normal(keys[5], shape_m, dtype=jnp.float32)
    t_m = jax.random.normal(keys[6], shape_m, dtype=jnp.float32)
    w_m = jax.random.uniform(keys[7], shape_m, dtype=jnp.float32)
    out_m = mse_loss_pallas(p_m, t_m, w_m, loss_weight=0.5, reduction="mean")
    assert jnp.allclose(out_m, 0.5 * jnp.mean((p_m - t_m) ** 2 * w_m), rtol=2e-4, atol=1e-6)

    # 4) GANLoss('vanilla') criterion + the generator half of AdversarialLoss.
    d_real = jax.random.normal(keys[8], (2, 1, 8, 8), dtype=jnp.float32)
    d_fake = jax.random.normal(keys[9], (2, 1, 8, 8), dtype=jnp.float32)

    def ref_bce_const(x, t):
        return jnp.mean(jax.nn.softplus(x) - t * x)

    g_loss = adversarial_generator_loss_pallas(d_fake, d_real)
    ref_g = (0.5 * ref_bce_const(d_real - jnp.mean(d_fake), 0.0)
             + 0.5 * ref_bce_const(d_fake - jnp.mean(d_real), 1.0))
    assert jnp.allclose(g_loss, ref_g, rtol=1e-5, atol=1e-6)

    jax.block_until_ready((out_mean, out_sum, out_none, out_r, out_m, g_loss))
    print("KERNEL_OK")
</pallas_src>

<mosaic_0001>
module attributes {stable_mosaic.version = 11 : i64} {
  func.func @kernel(%arg0: i32, %arg1: memref<16x128xf32, #tpu.memory_space<vmem>>, %arg2: memref<16x128xf32, #tpu.memory_space<vmem>>, %arg3: memref<1x128xf32, #tpu.memory_space<vmem>>) attributes {dimension_semantics = [#tpu.dimension_semantics<arbitrary>], iteration_bounds = array<i64: 1>, scalar_prefetch = 0 : i64, scratch_operands = 0 : i64, tpu.core_type = #tpu.core_type<tc>, window_params = [{pipeline_mode = #tpu.pipeline_mode<synchronous>, transform_indices = @transform_0, window_bounds = array<i64: 16, 128>}, {pipeline_mode = #tpu.pipeline_mode<synchronous>, transform_indices = @transform_1, window_bounds = array<i64: 16, 128>}, {pipeline_mode = #tpu.pipeline_mode<synchronous>, transform_indices = @transform_2, window_bounds = array<i64: 1, 128>}]} {
    %c0 = arith.constant 0 : index
    %c0_0 = arith.constant 0 : index
    %0 = vector.load %arg1[%c0, %c0_0] : memref<16x128xf32, #tpu.memory_space<vmem>>, vector<16x128xf32>
    %c0_1 = arith.constant 0 : index
    %c0_2 = arith.constant 0 : index
    %1 = vector.load %arg2[%c0_1, %c0_2] : memref<16x128xf32, #tpu.memory_space<vmem>>, vector<16x128xf32>
    %2 = arith.subf %0, %1 : vector<16x128xf32>
    %3 = arith.subf %0, %1 : vector<16x128xf32>
    %4 = arith.mulf %2, %3 : vector<16x128xf32>
    %cst = arith.constant dense<0.000000e+00> : vector<128xf32>
    %5 = vector.multi_reduction <add>, %4, %cst [0] : vector<16x128xf32> to vector<128xf32>
    %6 = vector.shape_cast %5 : vector<128xf32> to vector<1x128xf32>
    %c0_3 = arith.constant 0 : index
    %c0_4 = arith.constant 0 : index
    %7 = vector.load %arg3[%c0_3, %c0_4] : memref<1x128xf32, #tpu.memory_space<vmem>>, vector<1x128xf32>
    tpu.vector_store %arg3[%c0_3, %c0_4], %6 {strides = array<i32>} : memref<1x128xf32, #tpu.memory_space<vmem>>, vector<1x128xf32>,
    return
  }
  func.func @transform_0(%arg0: i32) -> (i32, i32) {
    %c0_i32 = arith.constant 0 : i32
    %c0_i32_0 = arith.constant 0 : i32
    %c0_i32_1 = arith.constant 0 : i32
    return %c0_i32, %c0_i32_0 : i32, i32
  }
  func.func @transform_1(%arg0: i32) -> (i32, i32) {
    %c0_i32 = arith.constant 0 : i32
    %c0_i32_0 = arith.constant 0 : i32
    %c0_i32_1 = arith.constant 0 : i32
    return %c0_i32, %c0_i32_0 : i32, i32
  }
  func.func @transform_2(%arg0: i32) -> (i32, i32) {
    %c0_i32 = arith.constant 0 : i32
    %c0_i32_0 = arith.constant 0 : i32
    %c0_i32_1 = arith.constant 0 : i32
    return %c0_i32, %c0_i32_0 : i32, i32
  }
}

</mosaic_0001>

<llo_original>
// kernel: mse_loss_pallas.1
$region0: #{mse_loss_pallas.1}
  #allocation0 [shape = 'u32[]', space=smem, size = 0x4, offset = 0x4, fixed_abs, tag = 'smem constant byte address 0x4 - core index']
  #allocation1 [shape = 'u32[72,128]{1,0:T(1,128)}', space=vmem, size = 0x9000, scoped, tag = 'internal scratch']
  %s0 = inlined_call_operand.vmem [shape: f32[16,128], index: 0, kind: input, shape index: {}]
  %s1 = inlined_call_operand.vmem [shape: f32[16,128], index: 1, kind: input, shape index: {}]
  %s2 = inlined_call_operand.vmem [shape: f32[1,128], index: 2, kind: output, shape index: {}]
  %s3 = sld [smem:[#allocation0]]
  $region18: #{mse_loss_pallas.1} parent=0
    _
  %s5 = ssub.s32 1, %s3
  %s6 = scalar_select 0, %s5, %s3
  // Predicated region
  $region2: #{mse_loss_pallas.1} parent=0 // pred_check
    _
  $region3: #{mse_loss_pallas.1} parent=0 // pred_check_branch
    %8 = sbr.rel (0) target = $region5
  $region4: #{mse_loss_pallas.1} parent=0 // pred_region
    _
  $region5: #{mse_loss_pallas.1} parent=0 // pred_fallthru
    _
  // Predicated region
  $region6: #{mse_loss_pallas.1} parent=0 // pred_check
    _
  $region7: #{mse_loss_pallas.1} parent=0 // pred_check_branch
    %10 = sbr.rel (0) target = $region9
  $region8: #{mse_loss_pallas.1} parent=0 // pred_region
    _
  $region9: #{mse_loss_pallas.1} parent=0 // pred_fallthru
    _
  %v11 = vld [vmem:[%s0] sm:$0xff]
  %v12 = vld [vmem:[%s0 + $0x8] sm:$0xff]
  %v13 = vld [vmem:[%s1] sm:$0xff]
  %v14 = vld [vmem:[%s1 + $0x8] sm:$0xff]
  %v15 = vsub.f32 %v11, %v13
  %v16 = vsub.f32 %v12, %v14
  %v17 = vmul.f32 %v15, %v15
  %v18 = vmul.f32 %v16, %v16
  %v19 = vadd.f32 %v17, %v18
  %v20 = vrot.slane %v19, 4
  %v21 = vadd.f32 %v19, %v20
  %v22 = vrot.slane %v21, 2
  %v23 = vadd.f32 %v21, %v22
  %v24 = vrot.slane %v23, 1
  %v25 = vadd.f32 %v23, %v24
  %26 = vst [vmem:[%s2] sm:$0x1] %v25
  // Predicated region
  $region10: #{mse_loss_pallas.1} parent=0 // pred_check
    _
  $region11: #{mse_loss_pallas.1} parent=0 // pred_check_branch
    %28 = sbr.rel (0) target = $region13
  $region12: #{mse_loss_pallas.1} parent=0 // pred_region
    _
  $region13: #{mse_loss_pallas.1} parent=0 // pred_fallthru
    _
  // Predicated region
  $region14: #{mse_loss_pallas.1} parent=0 // pred_check
    _
  $region15: #{mse_loss_pallas.1} parent=0 // pred_check_branch
    %30 = sbr.rel (0) target = $region17
  $region16: #{mse_loss_pallas.1} parent=0 // pred_region
    _
  $region17: #{mse_loss_pallas.1} parent=0 // pred_fallthru
    _

</llo_original>
